<compile_context>
chip_gen: v6e
topology: v6e:2x2x1
jax: 0.10.0
libtpu: 0.0.40
codegen_flags: <defaults>
</compile_context>

<pallas_src>
import functools

import jax
import jax.numpy as jnp
from jax import lax
from jax.experimental import pallas as pl
from jax.experimental.pallas import tpu as pltpu

BN_EPS = 1e-5


# --------------------------------------------------------------------------- #
# shared per-block body
# --------------------------------------------------------------------------- #
def _block_forward(residual, wb_ref, bb_ref, gamma, beta, w_base, b_base,
                   layers_per_block):
    """One ResidualBlock: (Linear -> ReLU) x layers_per_block -> BatchNorm1d -> +residual."""

    def layer(l, h):
        w = wb_ref[w_base + l]                          # (L, L) bf16
        b = bb_ref[b_base + l]                          # (1, L) f32
        h = jnp.dot(h.astype(jnp.bfloat16), w,
                    preferred_element_type=jnp.float32) + b
        return jnp.maximum(h, 0.0)

    h = lax.fori_loop(0, layers_per_block, layer, residual, unroll=True)

    # BatchNorm1d, training-mode batch stats: two-pass (robust) biased variance,
    # affine folded into one multiply-add on the (B, L) tensor.
    inv_b = jnp.float32(1.0 / h.shape[0])
    mean = jnp.sum(h, axis=0, keepdims=True) * inv_b
    d = h - mean
    var = jnp.maximum(jnp.sum(d * d, axis=0, keepdims=True) * inv_b, 0.0)
    scale = lax.rsqrt(var + BN_EPS) * gamma             # rsqrt -> EUP slot
    return d * scale + beta + residual


# --------------------------------------------------------------------------- #
# kernels
# --------------------------------------------------------------------------- #
def _resident_kernel(x_ref, w0_ref, b0_ref, wb_ref, bb_ref, g_ref, bt_ref,
                     wf_ref, bf_ref, o_ref, *, num_blocks, layers_per_block,
                     unroll_blocks):
    # initial_layer
    out = (jnp.dot(x_ref[...], w0_ref[...], preferred_element_type=jnp.float32)
           + b0_ref[...])

    # all residual blocks in one invocation (weights fully resident in VMEM)
    def block_body(blk, out):
        base = blk * layers_per_block
        return _block_forward(out, wb_ref, bb_ref, g_ref[blk], bt_ref[blk],
                              base, base, layers_per_block)

    out = lax.fori_loop(0, num_blocks, block_body, out, unroll=unroll_blocks)

    # final_layer (output lane-padded to a multiple of 128)
    o_ref[...] = (jnp.dot(out.astype(jnp.bfloat16), wf_ref[...],
                          preferred_element_type=jnp.float32)
                  + bf_ref[...]).astype(o_ref.dtype)


def _streamed_kernel(x_ref, w0_ref, b0_ref, wb_ref, bb_ref, g_ref, bt_ref,
                     wf_ref, bf_ref, o_ref, acc_ref, *, blocks_per_step,
                     layers_per_block, unroll_blocks):
    step = pl.program_id(0)

    # Step 0: initial Linear into the carried VMEM scratch (keep textually first,
    # guarded -- acc_ref is uninitialized before this write).
    @pl.when(step == 0)
    def _init():
        acc_ref[...] = (jnp.dot(x_ref[...], w0_ref[...],
                                preferred_element_type=jnp.float32)
                        + b0_ref[...])

    out = acc_ref[...]

    # G residual blocks per grid step; weights for these G blocks are the streamed
    # wb tile, the tiny bias / BN params are fully resident and indexed globally.
    def block_body(g, out):
        blk = step * blocks_per_step + g
        return _block_forward(out, wb_ref, bb_ref, g_ref[blk], bt_ref[blk],
                              g * layers_per_block, blk * layers_per_block,
                              layers_per_block)

    out = lax.fori_loop(0, blocks_per_step, block_body, out,
                        unroll=unroll_blocks)
    acc_ref[...] = out

    # Last step: final Linear.
    @pl.when(step == pl.num_programs(0) - 1)
    def _final():
        o_ref[...] = (jnp.dot(out.astype(jnp.bfloat16), wf_ref[...],
                              preferred_element_type=jnp.float32)
                      + bf_ref[...]).astype(o_ref.dtype)


# --------------------------------------------------------------------------- #
# parameter preparation (call once, cache across invocations)
# --------------------------------------------------------------------------- #
def prepare_params(params, *, num_blocks, layers_per_block):
    """bf16 weight casts, flattening and lane-dense output padding, hoisted out of
    the per-call wrapper so they are not re-executed every invocation."""
    w0, b0, wb, bb, gamma, beta, wf, bf = params
    in_size, L = w0.shape
    out_size = wf.shape[1]
    out_pad = int(pl.cdiv(out_size, 128) * 128)
    prepared = dict(
        w0=w0.astype(jnp.bfloat16),
        b0=b0.reshape(1, L).astype(jnp.float32),
        wb=wb.reshape(num_blocks * layers_per_block, L, L).astype(jnp.bfloat16),
        bb=bb.reshape(num_blocks * layers_per_block, 1, L).astype(jnp.float32),
        gamma=gamma.reshape(num_blocks, 1, L).astype(jnp.float32),
        beta=beta.reshape(num_blocks, 1, L).astype(jnp.float32),
        wf=jnp.zeros((L, out_pad), jnp.bfloat16).at[:, :out_size].set(
            wf.astype(jnp.bfloat16)),
        bf=jnp.zeros((1, out_pad), jnp.float32).at[:, :out_size].set(
            bf.astype(jnp.float32)),
    )
    meta = dict(num_blocks=num_blocks, layers_per_block=layers_per_block,
                in_size=in_size, layer_size=L, out_size=out_size,
                out_pad=out_pad)
    return prepared, meta


def _vmem_budget_bytes():
    """Generation-appropriate scoped-VMEM budget with compiler headroom:
    ~48 MiB on 64 MiB parts (v7x), ~96 MiB on 128 MiB parts (v5e/v6e)."""
    try:
        cap = int(pltpu.get_tpu_info().vmem_capacity_bytes)
    except Exception:
        cap = 128 << 20
    return max(min(cap * 3 // 4, cap - (16 << 20)), 16 << 20)


def _wants_triple_buffering():
    """v5e has the lowest HBM bandwidth: use 3-deep buffering for streamed weights."""
    try:
        kind = jax.devices()[0].device_kind.lower()
    except Exception:
        return False
    return ("v5 lite" in kind) or ("v5e" in kind) or ("v5litepod" in kind)


# --------------------------------------------------------------------------- #
# wrapper
# --------------------------------------------------------------------------- #
def residual_network(x, prepared, meta, *, force_streamed=False,
                     force_blocks_per_step=None):
    nb = meta["num_blocks"]
    lpb = meta["layers_per_block"]
    L = meta["layer_size"]
    out_size = meta["out_size"]
    out_pad = meta["out_pad"]
    B, in_size = x.shape
    assert in_size == meta["in_size"]

    p = prepared
    x_b = x.astype(jnp.bfloat16)
    args = (x_b, p["w0"], p["b0"], p["wb"], p["bb"], p["gamma"], p["beta"],
            p["wf"], p["bf"])

    def nbytes(a):
        return int(a.size) * a.dtype.itemsize

    wb_bytes = nbytes(p["wb"])
    small_bytes = sum(nbytes(a) for a in args) - wb_bytes
    out_bytes = B * out_pad * 4
    acc_bytes = B * L * 4
    budget = _vmem_budget_bytes()

    flops = 2 * B * (in_size * L + nb * lpb * L * L + L * out_pad)
    cost = pl.CostEstimate(flops=flops, transcendentals=nb * L,
                           bytes_accessed=sum(nbytes(a) for a in args) + out_bytes)

    cst2 = lambda s: (0, 0)
    cst3 = lambda s: (0, 0, 0)

    # conservative need: count everything twice (pipeline buffering) + slack
    resident_need = 2 * (small_bytes + wb_bytes + out_bytes) + (2 << 20)
    use_resident = (not force_streamed) and resident_need <= budget

    if use_resident:
        grid_spec = pltpu.PrefetchScalarGridSpec(
            num_scalar_prefetch=0,
            grid=(1,),
            in_specs=[
                pl.BlockSpec((B, in_size), cst2),            # x
                pl.BlockSpec((in_size, L), cst2),            # w0
                pl.BlockSpec((1, L), cst2),                  # b0
                pl.BlockSpec((nb * lpb, L, L), cst3),        # wb (fully resident)
                pl.BlockSpec((nb * lpb, 1, L), cst3),        # bb
                pl.BlockSpec((nb, 1, L), cst3),              # gamma
                pl.BlockSpec((nb, 1, L), cst3),              # beta
                pl.BlockSpec((L, out_pad), cst2),            # wf
                pl.BlockSpec((1, out_pad), cst2),            # bf
            ],
            out_specs=pl.BlockSpec((B, out_pad), cst2),
        )
        kern = functools.partial(_resident_kernel, num_blocks=nb,
                                 layers_per_block=lpb, unroll_blocks=nb <= 8)
        vmem_limit = int(min(max(resident_need + (4 << 20), 16 << 20), budget))
    else:
        n_buf = 3 if _wants_triple_buffering() else 2
        per_block_w = lpb * L * L * 2                        # bf16 weight bytes / block
        other = 2 * (small_bytes + out_bytes) + acc_bytes + (2 << 20)

        # G = largest divisor of num_blocks whose streamed buffers fit the budget
        G = force_blocks_per_step
        if G is None:
            G = 1
            for d in range(1, nb + 1):
                if nb % d == 0 and other + n_buf * d * per_block_w <= budget:
                    G = d
        assert nb % G == 0, "blocks_per_step must divide num_blocks"

        wb_spec = pl.BlockSpec((G * lpb, L, L), lambda s: (s, 0, 0))
        if n_buf != 2:
            try:  # deeper buffering for the streamed weights (v5e)
                wb_spec = pl.BlockSpec((G * lpb, L, L), lambda s: (s, 0, 0),
                                       pipeline_mode=pl.Buffered(n_buf))
            except Exception:
                pass

        grid_spec = pltpu.PrefetchScalarGridSpec(
            num_scalar_prefetch=0,
            grid=(nb // G,),
            in_specs=[
                pl.BlockSpec((B, in_size), cst2),            # x (resident)
                pl.BlockSpec((in_size, L), cst2),            # w0 (resident)
                pl.BlockSpec((1, L), cst2),                  # b0 (resident)
                wb_spec,                                      # streamed block weights
                pl.BlockSpec((nb * lpb, 1, L), cst3),        # bb (resident)
                pl.BlockSpec((nb, 1, L), cst3),              # gamma (resident)
                pl.BlockSpec((nb, 1, L), cst3),              # beta (resident)
                pl.BlockSpec((L, out_pad), cst2),            # wf (resident)
                pl.BlockSpec((1, out_pad), cst2),            # bf (resident)
            ],
            out_specs=pl.BlockSpec((B, out_pad), cst2),
            scratch_shapes=[pltpu.VMEM((B, L), jnp.float32)],  # carried activation
        )
        kern = functools.partial(_streamed_kernel, blocks_per_step=G,
                                 layers_per_block=lpb, unroll_blocks=G <= 8)
        vmem_limit = int(min(max(other + n_buf * G * per_block_w + (4 << 20),
                                 16 << 20), budget))

    out = pl.pallas_call(
        kern,
        grid_spec=grid_spec,
        out_shape=jax.ShapeDtypeStruct((B, out_pad), jnp.float32),
        compiler_params=pltpu.CompilerParams(
            dimension_semantics=("arbitrary",),
            vmem_limit_bytes=vmem_limit),
        cost_estimate=cost,
    )(*args)
    return out[:, :out_size]


# --------------------------------------------------------------------------- #
# params init + pure-JAX reference
# --------------------------------------------------------------------------- #
def init_params(key, input_size, output_size, layer_size, layers_per_block,
                num_blocks):
    ks = jax.random.split(key, 6)
    w0 = jax.random.normal(ks[0], (input_size, layer_size), jnp.float32) * 0.1
    b0 = jax.random.normal(ks[1], (1, layer_size), jnp.float32) * 0.1
    wb = jax.random.normal(
        ks[2], (num_blocks, layers_per_block, layer_size, layer_size),
        jnp.float32) * 0.1
    bb = jax.random.normal(
        ks[3], (num_blocks, layers_per_block, layer_size), jnp.float32) * 0.1
    gamma = jnp.ones((num_blocks, layer_size), jnp.float32)   # BN weight init
    beta = jnp.zeros((num_blocks, layer_size), jnp.float32)   # BN bias init
    wf = jax.random.normal(ks[4], (layer_size, output_size), jnp.float32) * 0.1
    bf = jax.random.normal(ks[5], (1, output_size), jnp.float32) * 0.1
    return w0, b0, wb, bb, gamma, beta, wf, bf


def residual_network_ref(x, params, *, num_blocks, layers_per_block,
                         match_kernel=True):
    """Pure-JAX reference.  match_kernel=True mirrors the kernel's bf16 matmul
    operands (f32 accumulation); match_kernel=False is the faithful f32 module."""
    w0, b0, wb, bb, gamma, beta, wf, bf = params
    cast = (lambda a: a.astype(jnp.bfloat16)) if match_kernel else (lambda a: a)
    out = jnp.dot(cast(x), cast(w0), preferred_element_type=jnp.float32) + b0
    for blk in range(num_blocks):
        residual = out
        h = out
        for l in range(layers_per_block):
            h = jnp.dot(cast(h), cast(wb[blk, l]),
                        preferred_element_type=jnp.float32) + bb[blk, l][None, :]
            h = jnp.maximum(h, 0.0)
        mean = jnp.mean(h, axis=0, keepdims=True)
        var = jnp.mean((h - mean) ** 2, axis=0, keepdims=True)
        h = (h - mean) / jnp.sqrt(var + BN_EPS)
        h = h * gamma[blk][None, :] + beta[blk][None, :]
        out = h + residual
    return jnp.dot(cast(out), cast(wf), preferred_element_type=jnp.float32) + bf


if __name__ == "__main__":
    # small shapes consistent with the module, chosen lane/sublane-dense
    batch = 8              # multiple of 8 sublanes (f32); kept whole for BN stats
    input_size = 32
    layer_size = 128       # multiple of 128 lanes
    output_size = 16       # padded to 128 inside prepare_params, sliced back
    layers_per_block = 2
    num_blocks = 2

    key = jax.random.PRNGKey(0)
    kx, kp = jax.random.split(key)
    x = jax.random.normal(kx, (batch, input_size), jnp.float32)
    params = init_params(kp, input_size, output_size, layer_size,
                         layers_per_block, num_blocks)

    # one-time parameter prep (hoisted out of the per-call path)
    prepared, meta = prepare_params(params, num_blocks=num_blocks,
                                    layers_per_block=layers_per_block)

    # default path (fully resident at these shapes)
    out = residual_network(x, prepared, meta)
    out = jax.block_until_ready(out)
    assert out.shape == (batch, output_size)

    ref_bf16 = residual_network_ref(x, params, num_blocks=num_blocks,
                                    layers_per_block=layers_per_block,
                                    match_kernel=True)
    assert jnp.allclose(out, ref_bf16, atol=1e-2, rtol=1e-2), \
        "resident path mismatch vs bf16-matmul reference"

    ref_f32 = residual_network_ref(x, params, num_blocks=num_blocks,
                                   layers_per_block=layers_per_block,
                                   match_kernel=False)
    assert jnp.allclose(out, ref_f32, atol=1e-1, rtol=1e-1), \
        "resident path mismatch vs f32 reference"

    # also exercise the streamed (grid > 1) path: 1 block per grid step
    out_s = residual_network(x, prepared, meta, force_streamed=True,
                             force_blocks_per_step=1)
    out_s = jax.block_until_ready(out_s)
    assert out_s.shape == (batch, output_size)
    assert jnp.allclose(out_s, ref_bf16, atol=1e-2, rtol=1e-2), \
        "streamed path mismatch vs bf16-matmul reference"

    print("KERNEL_OK")
</pallas_src>

<mosaic_0001>
module attributes {stable_mosaic.version = 11 : i64} {
  func.func @_resident_kernel(%arg0: i32, %arg1: memref<8x32xbf16, #tpu.memory_space<vmem>>, %arg2: memref<32x128xbf16, #tpu.memory_space<vmem>>, %arg3: memref<1x128xf32, #tpu.memory_space<vmem>>, %arg4: memref<4x128x128xbf16, #tpu.memory_space<vmem>>, %arg5: memref<4x1x128xf32, #tpu.memory_space<vmem>>, %arg6: memref<2x1x128xf32, #tpu.memory_space<vmem>>, %arg7: memref<2x1x128xf32, #tpu.memory_space<vmem>>, %arg8: memref<128x128xbf16, #tpu.memory_space<vmem>>, %arg9: memref<1x128xf32, #tpu.memory_space<vmem>>, %arg10: memref<8x128xf32, #tpu.memory_space<vmem>>) attributes {dimension_semantics = [#tpu.dimension_semantics<arbitrary>], iteration_bounds = array<i64: 1>, scalar_prefetch = 0 : i64, scratch_operands = 0 : i64, tpu.core_type = #tpu.core_type<tc>, window_params = [{pipeline_mode = #tpu.pipeline_mode<synchronous>, transform_indices = @transform_0, window_bounds = array<i64: 8, 32>}, {pipeline_mode = #tpu.pipeline_mode<synchronous>, transform_indices = @transform_1, window_bounds = array<i64: 32, 128>}, {pipeline_mode = #tpu.pipeline_mode<synchronous>, transform_indices = @transform_2, window_bounds = array<i64: 1, 128>}, {pipeline_mode = #tpu.pipeline_mode<synchronous>, transform_indices = @transform_3, window_bounds = array<i64: 4, 128, 128>}, {pipeline_mode = #tpu.pipeline_mode<synchronous>, transform_indices = @transform_4, window_bounds = array<i64: 4, 1, 128>}, {pipeline_mode = #tpu.pipeline_mode<synchronous>, transform_indices = @transform_5, window_bounds = array<i64: 2, 1, 128>}, {pipeline_mode = #tpu.pipeline_mode<synchronous>, transform_indices = @transform_6, window_bounds = array<i64: 2, 1, 128>}, {pipeline_mode = #tpu.pipeline_mode<synchronous>, transform_indices = @transform_7, window_bounds = array<i64: 128, 128>}, {pipeline_mode = #tpu.pipeline_mode<synchronous>, transform_indices = @transform_8, window_bounds = array<i64: 1, 128>}, {pipeline_mode = #tpu.pipeline_mode<synchronous>, transform_indices = @transform_9, window_bounds = array<i64: 8, 128>}]} {
    %c0 = arith.constant 0 : index
    %c0_0 = arith.constant 0 : index
    %0 = vector.load %arg1[%c0, %c0_0] : memref<8x32xbf16, #tpu.memory_space<vmem>>, vector<8x32xbf16>
    %c0_1 = arith.constant 0 : index
    %c0_2 = arith.constant 0 : index
    %1 = vector.load %arg2[%c0_1, %c0_2] : memref<32x128xbf16, #tpu.memory_space<vmem>>, vector<32x128xbf16>
    %cst = arith.constant dense<0.000000e+00> : vector<8x128xf32>
    %2 = tpu.matmul %0, %1, %cst {dimension_numbers = #tpu.dot_dimension_numbers<[1], [0], [0], [1], [0, 0, 1, 1], [], []>} : vector<8x32xbf16>, vector<32x128xbf16>, vector<8x128xf32> -> vector<8x128xf32>
    %c0_3 = arith.constant 0 : index
    %c0_4 = arith.constant 0 : index
    %3 = vector.load %arg3[%c0_3, %c0_4] : memref<1x128xf32, #tpu.memory_space<vmem>>, vector<1x128xf32>
    %4 = vector.broadcast %3 : vector<1x128xf32> to vector<8x128xf32>
    %5 = arith.addf %2, %4 : vector<8x128xf32>
    %c0_i32 = arith.constant 0 : i32
    %c2_i32 = arith.constant 2 : i32
    %6 = arith.muli %c0_i32, %c2_i32 : i32
    %7 = arith.index_cast %c0_i32 : i32 to index
    %c0_5 = arith.constant 0 : index
    %c0_6 = arith.constant 0 : index
    %8 = vector.load %arg6[%7, %c0_5, %c0_6] : memref<2x1x128xf32, #tpu.memory_space<vmem>>, vector<1x1x128xf32>
    %9 = vector.shape_cast %8 : vector<1x1x128xf32> to vector<1x128xf32>
    %10 = arith.index_cast %c0_i32 : i32 to index
    %c0_7 = arith.constant 0 : index
    %c0_8 = arith.constant 0 : index
    %11 = vector.load %arg7[%10, %c0_7, %c0_8] : memref<2x1x128xf32, #tpu.memory_space<vmem>>, vector<1x1x128xf32>
    %12 = vector.shape_cast %11 : vector<1x1x128xf32> to vector<1x128xf32>
    %c0_i32_9 = arith.constant 0 : i32
    %13 = arith.addi %6, %c0_i32_9 : i32
    %14 = arith.index_cast %13 : i32 to index
    %c0_10 = arith.constant 0 : index
    %c0_11 = arith.constant 0 : index
    %15 = vector.load %arg4[%14, %c0_10, %c0_11] : memref<4x128x128xbf16, #tpu.memory_space<vmem>>, vector<1x128x128xbf16>
    %16 = vector.shape_cast %15 : vector<1x128x128xbf16> to vector<128x128xbf16>
    %17 = arith.addi %6, %c0_i32_9 : i32
    %18 = arith.index_cast %17 : i32 to index
    %c0_12 = arith.constant 0 : index
    %c0_13 = arith.constant 0 : index
    %19 = vector.load %arg5[%18, %c0_12, %c0_13] : memref<4x1x128xf32, #tpu.memory_space<vmem>>, vector<1x1x128xf32>
    %20 = vector.shape_cast %19 : vector<1x1x128xf32> to vector<1x128xf32>
    %21 = arith.truncf %5 : vector<8x128xf32> to vector<8x128xbf16>
    %cst_14 = arith.constant dense<0.000000e+00> : vector<8x128xf32>
    %22 = tpu.matmul %21, %16, %cst_14 {dimension_numbers = #tpu.dot_dimension_numbers<[1], [0], [0], [1], [0, 0, 1, 1], [], []>} : vector<8x128xbf16>, vector<128x128xbf16>, vector<8x128xf32> -> vector<8x128xf32>
    %23 = vector.broadcast %20 : vector<1x128xf32> to vector<8x128xf32>
    %24 = arith.addf %22, %23 : vector<8x128xf32>
    %cst_15 = arith.constant 0.000000e+00 : f32
    %25 = vector.broadcast %cst_15 : f32 to vector<8x128xf32>
    %26 = arith.maximumf %24, %25 : vector<8x128xf32>
    %c1_i32 = arith.constant 1 : i32
    %27 = arith.addi %6, %c1_i32 : i32
    %28 = arith.index_cast %27 : i32 to index
    %c0_16 = arith.constant 0 : index
    %c0_17 = arith.constant 0 : index
    %29 = vector.load %arg4[%28, %c0_16, %c0_17] : memref<4x128x128xbf16, #tpu.memory_space<vmem>>, vector<1x128x128xbf16>
    %30 = vector.shape_cast %29 : vector<1x128x128xbf16> to vector<128x128xbf16>
    %31 = arith.addi %6, %c1_i32 : i32
    %32 = arith.index_cast %31 : i32 to index
    %c0_18 = arith.constant 0 : index
    %c0_19 = arith.constant 0 : index
    %33 = vector.load %arg5[%32, %c0_18, %c0_19] : memref<4x1x128xf32, #tpu.memory_space<vmem>>, vector<1x1x128xf32>
    %34 = vector.shape_cast %33 : vector<1x1x128xf32> to vector<1x128xf32>
    %35 = arith.truncf %26 : vector<8x128xf32> to vector<8x128xbf16>
    %cst_20 = arith.constant dense<0.000000e+00> : vector<8x128xf32>
    %36 = tpu.matmul %35, %30, %cst_20 {dimension_numbers = #tpu.dot_dimension_numbers<[1], [0], [0], [1], [0, 0, 1, 1], [], []>} : vector<8x128xbf16>, vector<128x128xbf16>, vector<8x128xf32> -> vector<8x128xf32>
    %37 = vector.broadcast %34 : vector<1x128xf32> to vector<8x128xf32>
    %38 = arith.addf %36, %37 : vector<8x128xf32>
    %cst_21 = arith.constant 0.000000e+00 : f32
    %39 = vector.broadcast %cst_21 : f32 to vector<8x128xf32>
    %40 = arith.maximumf %38, %39 : vector<8x128xf32>
    %c2_i32_22 = arith.constant 2 : i32
    %cst_23 = arith.constant dense<0.000000e+00> : vector<128xf32>
    %41 = vector.multi_reduction <add>, %40, %cst_23 [0] : vector<8x128xf32> to vector<128xf32>
    %42 = vector.shape_cast %41 : vector<128xf32> to vector<1x128xf32>
    %cst_24 = arith.constant 1.250000e-01 : f32
    %43 = vector.broadcast %cst_24 : f32 to vector<1x128xf32>
    %44 = arith.mulf %42, %43 : vector<1x128xf32>
    %45 = vector.broadcast %44 : vector<1x128xf32> to vector<8x128xf32>
    %46 = arith.subf %40, %45 : vector<8x128xf32>
    %47 = arith.mulf %46, %46 : vector<8x128xf32>
    %cst_25 = arith.constant dense<0.000000e+00> : vector<128xf32>
    %48 = vector.multi_reduction <add>, %47, %cst_25 [0] : vector<8x128xf32> to vector<128xf32>
    %49 = vector.shape_cast %48 : vector<128xf32> to vector<1x128xf32>
    %cst_26 = arith.constant 1.250000e-01 : f32
    %50 = vector.broadcast %cst_26 : f32 to vector<1x128xf32>
    %51 = arith.mulf %49, %50 : vector<1x128xf32>
    %cst_27 = arith.constant 0.000000e+00 : f32
    %52 = vector.broadcast %cst_27 : f32 to vector<1x128xf32>
    %53 = arith.maximumf %51, %52 : vector<1x128xf32>
    %cst_28 = arith.constant 9.99999974E-6 : f32
    %54 = vector.broadcast %cst_28 : f32 to vector<1x128xf32>
    %55 = arith.addf %53, %54 : vector<1x128xf32>
    %56 = math.rsqrt %55 : vector<1x128xf32>
    %57 = arith.mulf %56, %9 : vector<1x128xf32>
    %58 = vector.broadcast %57 : vector<1x128xf32> to vector<8x128xf32>
    %59 = arith.mulf %46, %58 : vector<8x128xf32>
    %60 = vector.broadcast %12 : vector<1x128xf32> to vector<8x128xf32>
    %61 = arith.addf %59, %60 : vector<8x128xf32>
    %62 = arith.addf %61, %5 : vector<8x128xf32>
    %c1_i32_29 = arith.constant 1 : i32
    %c2_i32_30 = arith.constant 2 : i32
    %63 = arith.muli %c1_i32_29, %c2_i32_30 : i32
    %64 = arith.index_cast %c1_i32_29 : i32 to index
    %c0_31 = arith.constant 0 : index
    %c0_32 = arith.constant 0 : index
    %65 = vector.load %arg6[%64, %c0_31, %c0_32] : memref<2x1x128xf32, #tpu.memory_space<vmem>>, vector<1x1x128xf32>
    %66 = vector.shape_cast %65 : vector<1x1x128xf32> to vector<1x128xf32>
    %67 = arith.index_cast %c1_i32_29 : i32 to index
    %c0_33 = arith.constant 0 : index
    %c0_34 = arith.constant 0 : index
    %68 = vector.load %arg7[%67, %c0_33, %c0_34] : memref<2x1x128xf32, #tpu.memory_space<vmem>>, vector<1x1x128xf32>
    %69 = vector.shape_cast %68 : vector<1x1x128xf32> to vector<1x128xf32>
    %c0_i32_35 = arith.constant 0 : i32
    %70 = arith.addi %63, %c0_i32_35 : i32
    %71 = arith.index_cast %70 : i32 to index
    %c0_36 = arith.constant 0 : index
    %c0_37 = arith.constant 0 : index
    %72 = vector.load %arg4[%71, %c0_36, %c0_37] : memref<4x128x128xbf16, #tpu.memory_space<vmem>>, vector<1x128x128xbf16>
    %73 = vector.shape_cast %72 : vector<1x128x128xbf16> to vector<128x128xbf16>
    %74 = arith.addi %63, %c0_i32_35 : i32
    %75 = arith.index_cast %74 : i32 to index
    %c0_38 = arith.constant 0 : index
    %c0_39 = arith.constant 0 : index
    %76 = vector.load %arg5[%75, %c0_38, %c0_39] : memref<4x1x128xf32, #tpu.memory_space<vmem>>, vector<1x1x128xf32>
    %77 = vector.shape_cast %76 : vector<1x1x128xf32> to vector<1x128xf32>
    %78 = arith.truncf %62 : vector<8x128xf32> to vector<8x128xbf16>
    %cst_40 = arith.constant dense<0.000000e+00> : vector<8x128xf32>
    %79 = tpu.matmul %78, %73, %cst_40 {dimension_numbers = #tpu.dot_dimension_numbers<[1], [0], [0], [1], [0, 0, 1, 1], [], []>} : vector<8x128xbf16>, vector<128x128xbf16>, vector<8x128xf32> -> vector<8x128xf32>
    %80 = vector.broadcast %77 : vector<1x128xf32> to vector<8x128xf32>
    %81 = arith.addf %79, %80 : vector<8x128xf32>
    %cst_41 = arith.constant 0.000000e+00 : f32
    %82 = vector.broadcast %cst_41 : f32 to vector<8x128xf32>
    %83 = arith.maximumf %81, %82 : vector<8x128xf32>
    %c1_i32_42 = arith.constant 1 : i32
    %84 = arith.addi %63, %c1_i32_42 : i32
    %85 = arith.index_cast %84 : i32 to index
    %c0_43 = arith.constant 0 : index
    %c0_44 = arith.constant 0 : index
    %86 = vector.load %arg4[%85, %c0_43, %c0_44] : memref<4x128x128xbf16, #tpu.memory_space<vmem>>, vector<1x128x128xbf16>
    %87 = vector.shape_cast %86 : vector<1x128x128xbf16> to vector<128x128xbf16>
    %88 = arith.addi %63, %c1_i32_42 : i32
    %89 = arith.index_cast %88 : i32 to index
    %c0_45 = arith.constant 0 : index
    %c0_46 = arith.constant 0 : index
    %90 = vector.load %arg5[%89, %c0_45, %c0_46] : memref<4x1x128xf32, #tpu.memory_space<vmem>>, vector<1x1x128xf32>
    %91 = vector.shape_cast %90 : vector<1x1x128xf32> to vector<1x128xf32>
    %92 = arith.truncf %83 : vector<8x128xf32> to vector<8x128xbf16>
    %cst_47 = arith.constant dense<0.000000e+00> : vector<8x128xf32>
    %93 = tpu.matmul %92, %87, %cst_47 {dimension_numbers = #tpu.dot_dimension_numbers<[1], [0], [0], [1], [0, 0, 1, 1], [], []>} : vector<8x128xbf16>, vector<128x128xbf16>, vector<8x128xf32> -> vector<8x128xf32>
    %94 = vector.broadcast %91 : vector<1x128xf32> to vector<8x128xf32>
    %95 = arith.addf %93, %94 : vector<8x128xf32>
    %cst_48 = arith.constant 0.000000e+00 : f32
    %96 = vector.broadcast %cst_48 : f32 to vector<8x128xf32>
    %97 = arith.maximumf %95, %96 : vector<8x128xf32>
    %c2_i32_49 = arith.constant 2 : i32
    %cst_50 = arith.constant dense<0.000000e+00> : vector<128xf32>
    %98 = vector.multi_reduction <add>, %97, %cst_50 [0] : vector<8x128xf32> to vector<128xf32>
    %99 = vector.shape_cast %98 : vector<128xf32> to vector<1x128xf32>
    %cst_51 = arith.constant 1.250000e-01 : f32
    %100 = vector.broadcast %cst_51 : f32 to vector<1x128xf32>
    %101 = arith.mulf %99, %100 : vector<1x128xf32>
    %102 = vector.broadcast %101 : vector<1x128xf32> to vector<8x128xf32>
    %103 = arith.subf %97, %102 : vector<8x128xf32>
    %104 = arith.mulf %103, %103 : vector<8x128xf32>
    %cst_52 = arith.constant dense<0.000000e+00> : vector<128xf32>
    %105 = vector.multi_reduction <add>, %104, %cst_52 [0] : vector<8x128xf32> to vector<128xf32>
    %106 = vector.shape_cast %105 : vector<128xf32> to vector<1x128xf32>
    %cst_53 = arith.constant 1.250000e-01 : f32
    %107 = vector.broadcast %cst_53 : f32 to vector<1x128xf32>
    %108 = arith.mulf %106, %107 : vector<1x128xf32>
    %cst_54 = arith.constant 0.000000e+00 : f32
    %109 = vector.broadcast %cst_54 : f32 to vector<1x128xf32>
    %110 = arith.maximumf %108, %109 : vector<1x128xf32>
    %cst_55 = arith.constant 9.99999974E-6 : f32
    %111 = vector.broadcast %cst_55 : f32 to vector<1x128xf32>
    %112 = arith.addf %110, %111 : vector<1x128xf32>
    %113 = math.rsqrt %112 : vector<1x128xf32>
    %114 = arith.mulf %113, %66 : vector<1x128xf32>
    %115 = vector.broadcast %114 : vector<1x128xf32> to vector<8x128xf32>
    %116 = arith.mulf %103, %115 : vector<8x128xf32>
    %117 = vector.broadcast %69 : vector<1x128xf32> to vector<8x128xf32>
    %118 = arith.addf %116, %117 : vector<8x128xf32>
    %119 = arith.addf %118, %62 : vector<8x128xf32>
    %c2_i32_56 = arith.constant 2 : i32
    %120 = arith.truncf %119 : vector<8x128xf32> to vector<8x128xbf16>
    %c0_57 = arith.constant 0 : index
    %c0_58 = arith.constant 0 : index
    %121 = vector.load %arg8[%c0_57, %c0_58] : memref<128x128xbf16, #tpu.memory_space<vmem>>, vector<128x128xbf16>
    %cst_59 = arith.constant dense<0.000000e+00> : vector<8x128xf32>
    %122 = tpu.matmul %120, %121, %cst_59 {dimension_numbers = #tpu.dot_dimension_numbers<[1], [0], [0], [1], [0, 0, 1, 1], [], []>} : vector<8x128xbf16>, vector<128x128xbf16>, vector<8x128xf32> -> vector<8x128xf32>
    %c0_60 = arith.constant 0 : index
    %c0_61 = arith.constant 0 : index
    %123 = vector.load %arg9[%c0_60, %c0_61] : memref<1x128xf32, #tpu.memory_space<vmem>>, vector<1x128xf32>
    %124 = vector.broadcast %123 : vector<1x128xf32> to vector<8x128xf32>
    %125 = arith.addf %122, %124 : vector<8x128xf32>
    %c0_62 = arith.constant 0 : index
    %c0_63 = arith.constant 0 : index
    %126 = vector.load %arg10[%c0_62, %c0_63] : memref<8x128xf32, #tpu.memory_space<vmem>>, vector<8x128xf32>
    tpu.vector_store %arg10[%c0_62, %c0_63], %125 {strides = array<i32>} : memref<8x128xf32, #tpu.memory_space<vmem>>, vector<8x128xf32>,
    return
  }
  func.func @transform_0(%arg0: i32) -> (i32, i32) {
    %c0_i32 = arith.constant 0 : i32
    %c0_i32_0 = arith.constant 0 : i32
    %c0_i32_1 = arith.constant 0 : i32
    return %c0_i32, %c0_i32_0 : i32, i32
  }
  func.func @transform_1(%arg0: i32) -> (i32, i32) {
    %c0_i32 = arith.constant 0 : i32
    %c0_i32_0 = arith.constant 0 : i32
    %c0_i32_1 = arith.constant 0 : i32
    return %c0_i32, %c0_i32_0 : i32, i32
  }
  func.func @transform_2(%arg0: i32) -> (i32, i32) {
    %c0_i32 = arith.constant 0 : i32
    %c0_i32_0 = arith.constant 0 : i32
    %c0_i32_1 = arith.constant 0 : i32
    return %c0_i32, %c0_i32_0 : i32, i32
  }
  func.func @transform_3(%arg0: i32) -> (i32, i32, i32) {
    %c0_i32 = arith.constant 0 : i32
    %c0_i32_0 = arith.constant 0 : i32
    %c0_i32_1 = arith.constant 0 : i32
    %c0_i32_2 = arith.constant 0 : i32
    return %c0_i32, %c0_i32_0, %c0_i32_1 : i32, i32, i32
  }
  func.func @transform_4(%arg0: i32) -> (i32, i32, i32) {
    %c0_i32 = arith.constant 0 : i32
    %c0_i32_0 = arith.constant 0 : i32
    %c0_i32_1 = arith.constant 0 : i32
    %c0_i32_2 = arith.constant 0 : i32
    return %c0_i32, %c0_i32_0, %c0_i32_1 : i32, i32, i32
  }
  func.func @transform_5(%arg0: i32) -> (i32, i32, i32) {
    %c0_i32 = arith.constant 0 : i32
    %c0_i32_0 = arith.constant 0 : i32
    %c0_i32_1 = arith.constant 0 : i32
    %c0_i32_2 = arith.constant 0 : i32
    return %c0_i32, %c0_i32_0, %c0_i32_1 : i32, i32, i32
  }
  func.func @transform_6(%arg0: i32) -> (i32, i32, i32) {
    %c0_i32 = arith.constant 0 : i32
    %c0_i32_0 = arith.constant 0 : i32
    %c0_i32_1 = arith.constant 0 : i32
    %c0_i32_2 = arith.constant 0 : i32
    return %c0_i32, %c0_i32_0, %c0_i32_1 : i32, i32, i32
  }
  func.func @transform_7(%arg0: i32) -> (i32, i32) {
    %c0_i32 = arith.constant 0 : i32
    %c0_i32_0 = arith.constant 0 : i32
    %c0_i32_1 = arith.constant 0 : i32
    return %c0_i32, %c0_i32_0 : i32, i32
  }
  func.func @transform_8(%arg0: i32) -> (i32, i32) {
    %c0_i32 = arith.constant 0 : i32
    %c0_i32_0 = arith.constant 0 : i32
    %c0_i32_1 = arith.constant 0 : i32
    return %c0_i32, %c0_i32_0 : i32, i32
  }
  func.func @transform_9(%arg0: i32) -> (i32, i32) {
    %c0_i32 = arith.constant 0 : i32
    %c0_i32_0 = arith.constant 0 : i32
    %c0_i32_1 = arith.constant 0 : i32
    return %c0_i32, %c0_i32_0 : i32, i32
  }
}

</mosaic_0001>

<llo_original>
// kernel: tpu_custom_call.1
$region0: #{tpu_custom_call.1}
  #allocation0 [shape = 'u32[]', space=smem, size = 0x4, offset = 0x4, fixed_abs, tag = 'smem constant byte address 0x4 - core index']
  #allocation1 [shape = 'u32[144,128]{1,0:T(1,128)}', space=vmem, size = 0x12000, scoped, tag = 'internal scratch']
  %s0 = inlined_call_operand.hbm [shape: bf16[8,32], index: 0, kind: input, shape index: {}]
  %s1 = inlined_call_operand.hbm [shape: bf16[32,128], index: 1, kind: input, shape index: {}]
  %s2 = inlined_call_operand.vmem [shape: f32[1,128], index: 2, kind: input, shape index: {}]
  %s3 = inlined_call_operand.hbm [shape: bf16[4,128,128], index: 3, kind: input, shape index: {}]
  %s4 = inlined_call_operand.vmem [shape: f32[4,1,128], index: 4, kind: input, shape index: {}]
  %s5 = inlined_call_operand.vmem [shape: f32[2,1,128], index: 5, kind: input, shape index: {}]
  %s6 = inlined_call_operand.vmem [shape: f32[2,1,128], index: 6, kind: input, shape index: {}]
  %s7 = inlined_call_operand.hbm [shape: bf16[128,128], index: 7, kind: input, shape index: {}]
  %s8 = inlined_call_operand.vmem [shape: f32[1,128], index: 8, kind: input, shape index: {}]
  %s9 = inlined_call_operand.hbm [shape: f32[8,128], index: 9, kind: output, shape index: {}]
  %s10 = sld [smem:[#allocation0]]
  $region62: #{tpu_custom_call.1} parent=0
    _
  %s12 = ssub.s32 1, %s10
  %s13 = scalar_select 0, %s12, %s10
  $region1: #{tpu_custom_call.1} parent=0
    #allocation2 [shape = 'u8[2048]{0}', space=vmem, size = 0x800, scoped, tag = 'input window, operand 0, single buffered']
    #allocation3 [shape = 's32[1]{0}', space=sflag, size = 0x4, scoped, tag = 'scoped memory for tpu_custom_call.1']
    #allocation4 [shape = 's32[1]{0}', space=sflag, size = 0x4, scoped, tag = 'scoped memory for tpu_custom_call.1']
    #allocation5 [shape = 'u8[8192]{0}', space=vmem, size = 0x2000, scoped, tag = 'input window, operand 1, single buffered']
    #allocation6 [shape = 's32[1]{0}', space=sflag, size = 0x4, scoped, tag = 'scoped memory for tpu_custom_call.1']
    #allocation7 [shape = 'u8[131072]{0}', space=vmem, size = 0x20000, scoped, tag = 'input window, operand 3, single buffered']
    #allocation8 [shape = 'u8[32768]{0}', space=vmem, size = 0x8000, scoped, tag = 'input window, operand 7, single buffered']
    #allocation9 [shape = 's32[1]{0}', space=sflag, size = 0x4, scoped, tag = 'scoped memory for tpu_custom_call.1']
    #allocation10 [shape = 'u8[4096]{0}', space=vmem, size = 0x1000, scoped, tag = 'output window, operand 0, single buffered']
    %14 = vsyncpa [#allocation3], 0
    %15 = vsyncpa [#allocation6], 0
    %16 = vsyncpa [#allocation9], 0
    %17 = vsyncpa [#allocation4], 0
    // Predicated region
    $region2: #{tpu_custom_call.1} parent=1 // pred_check
      _
    $region3: #{tpu_custom_call.1} parent=1 // pred_check_branch
      %19 = sbr.rel (0) target = $region5
    $region4: #{tpu_custom_call.1} parent=1 // pred_region
      %s21 = ssub.s32 64, 64
      %22 = vsyncadd [#allocation3], %s21
      %s24 = sshll.u32 [#allocation2], 4
      %s25 = int_to_ptr.vmem [resolvable:$true] %s24
      %27 = dma.hbm_to_vmem [thread:$0]  %s0, 64, %s25, [#allocation3]
    $region5: #{tpu_custom_call.1} parent=1 // pred_fallthru
      _
    // Predicated region
    $region6: #{tpu_custom_call.1} parent=1 // pred_check
      _
    $region7: #{tpu_custom_call.1} parent=1 // pred_check_branch
      %29 = sbr.rel (0) target = $region9
    $region8: #{tpu_custom_call.1} parent=1 // pred_region
      %s31 = ssub.s32 256, 256
      %32 = vsyncadd [#allocation6], %s31
      %s33 = sshll.u32 [#allocation5], 4
      %s34 = int_to_ptr.vmem [resolvable:$true] %s33
      %39 = dma.hbm_to_vmem [thread:$0]  %s1, 256, %s34, [#allocation6], 64, 64, 4
    $region9: #{tpu_custom_call.1} parent=1 // pred_fallthru
      _
    // Predicated region
    $region10: #{tpu_custom_call.1} parent=1 // pred_check
      _
    $region11: #{tpu_custom_call.1} parent=1 // pred_check_branch
      %41 = sbr.rel (0) target = $region13
    $region12: #{tpu_custom_call.1} parent=1 // pred_region
      _
    $region13: #{tpu_custom_call.1} parent=1 // pred_fallthru
      _
    // Predicated region
    $region14: #{tpu_custom_call.1} parent=1 // pred_check
      _
    $region15: #{tpu_custom_call.1} parent=1 // pred_check_branch
      %43 = sbr.rel (0) target = $region17
    $region16: #{tpu_custom_call.1} parent=1 // pred_region
      %s45 = ssub.s32 4096, 4096
      %46 = vsyncadd [#allocation6], %s45
      %s47 = sshll.u32 [#allocation7], 4
      %s48 = int_to_ptr.vmem [resolvable:$true] %s47
      %53 = dma.hbm_to_vmem [thread:$0]  %s3, 4096, %s48, [#allocation6], 64, 64, 4
    $region17: #{tpu_custom_call.1} parent=1 // pred_fallthru
      _
    // Predicated region
    $region18: #{tpu_custom_call.1} parent=1 // pred_check
      _
    $region19: #{tpu_custom_call.1} parent=1 // pred_check_branch
      %55 = sbr.rel (0) target = $region21
    $region20: #{tpu_custom_call.1} parent=1 // pred_region
      _
    $region21: #{tpu_custom_call.1} parent=1 // pred_fallthru
      _
    // Predicated region
    $region22: #{tpu_custom_call.1} parent=1 // pred_check
      _
    $region23: #{tpu_custom_call.1} parent=1 // pred_check_branch
      %57 = sbr.rel (0) target = $region25
    $region24: #{tpu_custom_call.1} parent=1 // pred_region
      _
    $region25: #{tpu_custom_call.1} parent=1 // pred_fallthru
      _
    // Predicated region
    $region26: #{tpu_custom_call.1} parent=1 // pred_check
      _
    $region27: #{tpu_custom_call.1} parent=1 // pred_check_branch
      %59 = sbr.rel (0) target = $region29
    $region28: #{tpu_custom_call.1} parent=1 // pred_region
      _
    $region29: #{tpu_custom_call.1} parent=1 // pred_fallthru
      _
    // Predicated region
    $region30: #{tpu_custom_call.1} parent=1 // pred_check
      _
    $region31: #{tpu_custom_call.1} parent=1 // pred_check_branch
      %61 = sbr.rel (0) target = $region33
    $region32: #{tpu_custom_call.1} parent=1 // pred_region
      %s63 = ssub.s32 1024, 1024
      %64 = vsyncadd [#allocation9], %s63
      %s65 = sshll.u32 [#allocation8], 4
      %s66 = int_to_ptr.vmem [resolvable:$true] %s65
      %71 = dma.hbm_to_vmem [thread:$0]  %s7, 1024, %s66, [#allocation9], 64, 64, 4
    $region33: #{tpu_custom_call.1} parent=1 // pred_fallthru
      _
    // Predicated region
    $region34: #{tpu_custom_call.1} parent=1 // pred_check
      _
    $region35: #{tpu_custom_call.1} parent=1 // pred_check_branch
      %73 = sbr.rel (0) target = $region37
    $region36: #{tpu_custom_call.1} parent=1 // pred_region
      _
    $region37: #{tpu_custom_call.1} parent=1 // pred_fallthru
      _
    // Predicated region
    $region38: #{tpu_custom_call.1} parent=1 // pred_check
      _
    $region39: #{tpu_custom_call.1} parent=1 // pred_check_branch
      %75 = sbr.rel (0) target = $region41
    $region40: #{tpu_custom_call.1} parent=1 // pred_region
      %76 = dma.done [#allocation3], 64
    $region41: #{tpu_custom_call.1} parent=1 // pred_fallthru
      _
    // Predicated region
    $region42: #{tpu_custom_call.1} parent=1 // pred_check
      _
    $region43: #{tpu_custom_call.1} parent=1 // pred_check_branch
      %78 = sbr.rel (0) target = $region45
    $region44: #{tpu_custom_call.1} parent=1 // pred_region
      %79 = dma.done [#allocation6], 256
    $region45: #{tpu_custom_call.1} parent=1 // pred_fallthru
      _
    // Predicated region
    $region46: #{tpu_custom_call.1} parent=1 // pred_check
      _
    $region47: #{tpu_custom_call.1} parent=1 // pred_check_branch
      %81 = sbr.rel (0) target = $region49
    $region48: #{tpu_custom_call.1} parent=1 // pred_region
      %82 = dma.done [#allocation6], 4096
    $region49: #{tpu_custom_call.1} parent=1 // pred_fallthru
      _
    // Predicated region
    $region50: #{tpu_custom_call.1} parent=1 // pred_check
      _
    $region51: #{tpu_custom_call.1} parent=1 // pred_check_branch
      %84 = sbr.rel (0) target = $region53
    $region52: #{tpu_custom_call.1} parent=1 // pred_region
      %85 = dma.done [#allocation9], 1024
    $region53: #{tpu_custom_call.1} parent=1 // pred_fallthru
      _
    %v87 = vld [vmem:[#allocation2] sm:$0xf]
    %v88 = vld [vmem:[#allocation5] sm:$0xf]
    %v89 = vld [vmem:[#allocation5 + $0x4] sm:$0xf]
    %v90 = vld [vmem:[#allocation5 + $0x8] sm:$0xf]
    %v91 = vld [vmem:[#allocation5 + $0xc] sm:$0xf]
    %v92 = vld [vmem:[%s2] sm:$0x1]
    %v94 = vlaneseq
    %v95 = vshrl.u32 %v94, 7
    %v96 = vsub.s32 0, %v95
    %v97 = vrot.slane %v92, %v96
    %v103 = vunpack.c.l.b16 %v88
    %v104 = vunpack.c.l.b16 %v89
    %v105 = vunpack.c.l.b16 %v90
    %v106 = vunpack.c.l.b16 %v91
    %v107 = vpack.c.b16 %v104, %v103
    %v108 = vpack.c.b16 %v106, %v105
    %vm111 = vcmask 261120
    %v113 = vsel %vm111, %v87, 0
    %115 = vmatprep.subr.bf16.mxu0 0
    %116 = vmatpush1.bf16.msra.mxu0 0
    %117 = vmatprep.subr.bf16.mxu0 0
    %118 = vmatpush1.bf16.msra.mxu0 0
    %119 = vmatprep.subr.bf16.mxu0 0
    %120 = vmatpush1.bf16.msra.mxu0 0
    %121 = vmatprep.subr.bf16.mxu0 0
    %122 = vmatpush1.bf16.msra.mxu0 0
    %123 = vmatprep.subr.bf16.mxu0 0
    %124 = vmatpush1.bf16.msra.mxu0 0
    %125 = vmatprep.subr.bf16.mxu0 0
    %126 = vmatpush1.bf16.msra.mxu0 0
    %127 = vmatprep.subr.bf16.mxu0 0
    %128 = vmatpush1.bf16.msra.mxu0 %v108
    %129 = vmatprep.subr.bf16.mxu0 0
    %130 = vmatpush1.bf16.msra.mxu0 %v107
    %131 = vmatprep.subr.bf16.mxu0 0
    %132 = vmatpush2.bf16.msra.mxu0 0
    %133 = vmatprep.subr.bf16.mxu0 0
    %134 = vmatpush2.bf16.msra.mxu0 0
    %135 = vmatprep.subr.bf16.mxu0 0
    %136 = vmatpush2.bf16.msra.mxu0 0
    %137 = vmatprep.subr.bf16.mxu0 0
    %138 = vmatpush2.bf16.msra.mxu0 0
    %139 = vmatprep.subr.bf16.mxu0 0
    %140 = vmatpush2.bf16.msra.mxu0 0
    %141 = vmatprep.subr.bf16.mxu0 0
    %142 = vmatpush2.bf16.msra.mxu0 0
    %143 = vmatprep.subr.bf16.mxu0 0
    %144 = vmatpush2.bf16.msra.mxu0 0
    %145 = vmatprep.subr.bf16.mxu0 0
    %146 = vmatpush2.bf16.msra.mxu0 0
    %147 = vmatprep.mubr.bf16.mxu0 0
    %148 = vmatmul.mubr.bf16.gmra.mxu0 %v113
    %v149 = vpop.f32.mrf.mxu0
    %v150 = vadd.f32 %v97, %v149
    %v151 = vpop.f32.mrf.mxu0
    %v152 = vpop.f32.mrf.mxu0
    %v153 = vpop.f32.mrf.mxu0
    %154 = vdwg.mxu0
    %v155 = vld [vmem:[%s5] sm:$0x1]
    %v156 = vld [vmem:[%s6] sm:$0x1]
    %v157 = vld [vmem:[#allocation7] sm:$0xf]
    %v158 = vld [vmem:[#allocation7 + $0x4] sm:$0xf]
    %v159 = vld [vmem:[#allocation7 + $0x8] sm:$0xf]
    %v160 = vld [vmem:[#allocation7 + $0xc] sm:$0xf]
    %v161 = vld [vmem:[#allocation7 + $0x10] sm:$0xf]
    %v162 = vld [vmem:[#allocation7 + $0x14] sm:$0xf]
    %v163 = vld [vmem:[#allocation7 + $0x18] sm:$0xf]
    %v164 = vld [vmem:[#allocation7 + $0x1c] sm:$0xf]
    %v165 = vld [vmem:[#allocation7 + $0x20] sm:$0xf]
    %v166 = vld [vmem:[#allocation7 + $0x24] sm:$0xf]
    %v167 = vld [vmem:[#allocation7 + $0x28] sm:$0xf]
    %v168 = vld [vmem:[#allocation7 + $0x2c] sm:$0xf]
    %v169 = vld [vmem:[#allocation7 + $0x30] sm:$0xf]
    %v170 = vld [vmem:[#allocation7 + $0x34] sm:$0xf]
    %v171 = vld [vmem:[#allocation7 + $0x38] sm:$0xf]
    %v172 = vld [vmem:[#allocation7 + $0x3c] sm:$0xf]
    %v173 = vld [vmem:[%s4] sm:$0x1]
    %v174 = vpack.c.bf16 %v150, %v150
    %v176 = vlaneseq
    %v177 = vshrl.u32 %v176, 7
    %v178 = vsub.s32 0, %v177
    %v179 = vrot.slane %v173, %v178
    %v197 = vunpack.c.l.b16 %v157
    %v198 = vunpack.c.l.b16 %v158
    %v199 = vunpack.c.l.b16 %v159
    %v200 = vunpack.c.l.b16 %v160
    %v201 = vunpack.c.l.b16 %v161
    %v202 = vunpack.c.l.b16 %v162
    %v203 = vunpack.c.l.b16 %v163
    %v204 = vunpack.c.l.b16 %v164
    %v205 = vunpack.c.l.b16 %v165
    %v206 = vunpack.c.l.b16 %v166
    %v207 = vunpack.c.l.b16 %v167
    %v208 = vunpack.c.l.b16 %v168
    %v209 = vunpack.c.l.b16 %v169
    %v210 = vunpack.c.l.b16 %v170
    %v211 = vunpack.c.l.b16 %v171
    %v212 = vunpack.c.l.b16 %v172
    %v213 = vpack.c.b16 %v198, %v197
    %v214 = vpack.c.b16 %v200, %v199
    %v215 = vpack.c.b16 %v202, %v201
    %v216 = vpack.c.b16 %v204, %v203
    %v217 = vpack.c.b16 %v206, %v205
    %v218 = vpack.c.b16 %v208, %v207
    %v219 = vpack.c.b16 %v210, %v209
    %v220 = vpack.c.b16 %v212, %v211
    %229 = vmatprep.subr.bf16.mxu0 0
    %230 = vmatpush1.bf16.msra.mxu0 %v220
    %231 = vmatprep.subr.bf16.mxu0 0
    %232 = vmatpush1.bf16.msra.mxu0 %v219
    %233 = vmatprep.subr.bf16.mxu0 0
    %234 = vmatpush1.bf16.msra.mxu0 %v218
    %235 = vmatprep.subr.bf16.mxu0 0
    %236 = vmatpush1.bf16.msra.mxu0 %v217
    %237 = vmatprep.subr.bf16.mxu0 0
    %238 = vmatpush1.bf16.msra.mxu0 %v216
    %239 = vmatprep.subr.bf16.mxu0 0
    %240 = vmatpush1.bf16.msra.mxu0 %v215
    %241 = vmatprep.subr.bf16.mxu0 0
    %242 = vmatpush1.bf16.msra.mxu0 %v214
    %243 = vmatprep.subr.bf16.mxu0 0
    %244 = vmatpush1.bf16.msra.mxu0 %v213
    %245 = vmatprep.subr.bf16.mxu0 0
    %246 = vmatpush2.bf16.msra.mxu0 0
    %247 = vmatprep.subr.bf16.mxu0 0
    %248 = vmatpush2.bf16.msra.mxu0 0
    %249 = vmatprep.subr.bf16.mxu0 0
    %250 = vmatpush2.bf16.msra.mxu0 0
    %251 = vmatprep.subr.bf16.mxu0 0
    %252 = vmatpush2.bf16.msra.mxu0 0
    %253 = vmatprep.subr.bf16.mxu0 0
    %254 = vmatpush2.bf16.msra.mxu0 0
    %255 = vmatprep.subr.bf16.mxu0 0
    %256 = vmatpush2.bf16.msra.mxu0 0
    %257 = vmatprep.subr.bf16.mxu0 0
    %258 = vmatpush2.bf16.msra.mxu0 0
    %259 = vmatprep.subr.bf16.mxu0 0
    %260 = vmatpush2.bf16.msra.mxu0 0
    %261 = vmatprep.mubr.bf16.mxu0 0
    %262 = vmatmul.mubr.bf16.gmra.mxu0 %v174
    %v263 = vpop.f32.mrf.mxu0
    %v264 = vadd.f32 %v179, %v263
    %v265 = vpop.f32.mrf.mxu0
    %v266 = vpop.f32.mrf.mxu0
    %v267 = vpop.f32.mrf.mxu0
    %268 = vdwg.mxu0
    %v269 = vmax.f32 %v264, 0.0
    %s270 = scalar_lea.vmem [#allocation7], 64
    %v271 = vld [vmem:[%s270] sm:$0xf]
    %v272 = vld [vmem:[%s270 + $0x4] sm:$0xf]
    %v273 = vld [vmem:[%s270 + $0x8] sm:$0xf]
    %v274 = vld [vmem:[%s270 + $0xc] sm:$0xf]
    %v275 = vld [vmem:[%s270 + $0x10] sm:$0xf]
    %v276 = vld [vmem:[%s270 + $0x14] sm:$0xf]
    %v277 = vld [vmem:[%s270 + $0x18] sm:$0xf]
    %v278 = vld [vmem:[%s270 + $0x1c] sm:$0xf]
    %v279 = vld [vmem:[%s270 + $0x20] sm:$0xf]
    %v280 = vld [vmem:[%s270 + $0x24] sm:$0xf]
    %v281 = vld [vmem:[%s270 + $0x28] sm:$0xf]
    %v282 = vld [vmem:[%s270 + $0x2c] sm:$0xf]
    %v283 = vld [vmem:[%s270 + $0x30] sm:$0xf]
    %v284 = vld [vmem:[%s270 + $0x34] sm:$0xf]
    %v285 = vld [vmem:[%s270 + $0x38] sm:$0xf]
    %v286 = vld [vmem:[%s270 + $0x3c] sm:$0xf]
    %s287 = scalar_lea.vmem %s4, 1
    %v288 = vld [vmem:[%s287] sm:$0x1]
    %v289 = vpack.c.bf16 %v269, %v269
    %v291 = vlaneseq
    %v292 = vshrl.u32 %v291, 7
    %v293 = vsub.s32 0, %v292
    %v294 = vrot.slane %v288, %v293
    %v312 = vunpack.c.l.b16 %v271
    %v313 = vunpack.c.l.b16 %v272
    %v314 = vunpack.c.l.b16 %v273
    %v315 = vunpack.c.l.b16 %v274
    %v316 = vunpack.c.l.b16 %v275
    %v317 = vunpack.c.l.b16 %v276
    %v318 = vunpack.c.l.b16 %v277
    %v319 = vunpack.c.l.b16 %v278
    %v320 = vunpack.c.l.b16 %v279
    %v321 = vunpack.c.l.b16 %v280
    %v322 = vunpack.c.l.b16 %v281
    %v323 = vunpack.c.l.b16 %v282
    %v324 = vunpack.c.l.b16 %v283
    %v325 = vunpack.c.l.b16 %v284
    %v326 = vunpack.c.l.b16 %v285
    %v327 = vunpack.c.l.b16 %v286
    %v328 = vpack.c.b16 %v313, %v312
    %v329 = vpack.c.b16 %v315, %v314
    %v330 = vpack.c.b16 %v317, %v316
    %v331 = vpack.c.b16 %v319, %v318
    %v332 = vpack.c.b16 %v321, %v320
    %v333 = vpack.c.b16 %v323, %v322
    %v334 = vpack.c.b16 %v325, %v324
    %v335 = vpack.c.b16 %v327, %v326
    %344 = vmatprep.subr.bf16.mxu0 0
    %345 = vmatpush1.bf16.msra.mxu0 %v335
    %346 = vmatprep.subr.bf16.mxu0 0
    %347 = vmatpush1.bf16.msra.mxu0 %v334
    %348 = vmatprep.subr.bf16.mxu0 0
    %349 = vmatpush1.bf16.msra.mxu0 %v333
    %350 = vmatprep.subr.bf16.mxu0 0
    %351 = vmatpush1.bf16.msra.mxu0 %v332
    %352 = vmatprep.subr.bf16.mxu0 0
    %353 = vmatpush1.bf16.msra.mxu0 %v331
    %354 = vmatprep.subr.bf16.mxu0 0
    %355 = vmatpush1.bf16.msra.mxu0 %v330
    %356 = vmatprep.subr.bf16.mxu0 0
    %357 = vmatpush1.bf16.msra.mxu0 %v329
    %358 = vmatprep.subr.bf16.mxu0 0
    %359 = vmatpush1.bf16.msra.mxu0 %v328
    %360 = vmatprep.subr.bf16.mxu0 0
    %361 = vmatpush2.bf16.msra.mxu0 0
    %362 = vmatprep.subr.bf16.mxu0 0
    %363 = vmatpush2.bf16.msra.mxu0 0
    %364 = vmatprep.subr.bf16.mxu0 0
    %365 = vmatpush2.bf16.msra.mxu0 0
    %366 = vmatprep.subr.bf16.mxu0 0
    %367 = vmatpush2.bf16.msra.mxu0 0
    %368 = vmatprep.subr.bf16.mxu0 0
    %369 = vmatpush2.bf16.msra.mxu0 0
    %370 = vmatprep.subr.bf16.mxu0 0
    %371 = vmatpush2.bf16.msra.mxu0 0
    %372 = vmatprep.subr.bf16.mxu0 0
    %373 = vmatpush2.bf16.msra.mxu0 0
    %374 = vmatprep.subr.bf16.mxu0 0
    %375 = vmatpush2.bf16.msra.mxu0 0
    %376 = vmatprep.mubr.bf16.mxu0 0
    %377 = vmatmul.mubr.bf16.gmra.mxu0 %v289
    %v378 = vpop.f32.mrf.mxu0
    %v379 = vadd.f32 %v294, %v378
    %v380 = vpop.f32.mrf.mxu0
    %v381 = vpop.f32.mrf.mxu0
    %v382 = vpop.f32.mrf.mxu0
    %383 = vdwg.mxu0
    %v384 = vmax.f32 %v379, 0.0
    %v385 = vrot.slane %v384, 4
    %v386 = vadd.f32 %v384, %v385
    %v387 = vrot.slane %v386, 2
    %v388 = vadd.f32 %v386, %v387
    %v389 = vrot.slane %v388, 1
    %v390 = vadd.f32 %v388, %v389
    %v391 = vmul.f32 %v390, 0.125
    %v392 = vsub.f32 %v384, %v391
    %v393 = vmul.f32 %v392, %v392
    %v394 = vrot.slane %v393, 4
    %v395 = vadd.f32 %v393, %v394
    %v396 = vrot.slane %v395, 2
    %v397 = vadd.f32 %v395, %v396
    %v398 = vrot.slane %v397, 1
    %v399 = vadd.f32 %v397, %v398
    %v400 = vmul.f32 %v399, 0.125
    %v401 = vmax.f32 %v400, 0.0
    %v402 = vadd.f32 %v401, 1e-05
    %v403 = vrsqrt.pop %v402
    %v404 = vmul.f32 %v403, %v155
    %v405 = vlaneseq
    %v406 = vshrl.u32 %v405, 7
    %v407 = vsub.s32 0, %v406
    %v408 = vrot.slane %v404, %v407
    %v409 = vmul.f32 %v392, %v408
    %v411 = vlaneseq
    %v412 = vshrl.u32 %v411, 7
    %v413 = vsub.s32 0, %v412
    %v414 = vrot.slane %v156, %v413
    %v416 = vadd.f32 %v409, %v414
    %v417 = vadd.f32 %v416, %v150
    %s418 = scalar_lea.vmem %s5, 1
    %v419 = vld [vmem:[%s418] sm:$0x1]
    %s420 = scalar_lea.vmem %s6, 1
    %v421 = vld [vmem:[%s420] sm:$0x1]
    %s422 = scalar_lea.vmem [#allocation7], 128
    %v423 = vld [vmem:[%s422] sm:$0xf]
    %v424 = vld [vmem:[%s422 + $0x4] sm:$0xf]
    %v425 = vld [vmem:[%s422 + $0x8] sm:$0xf]
    %v426 = vld [vmem:[%s422 + $0xc] sm:$0xf]
    %v427 = vld [vmem:[%s422 + $0x10] sm:$0xf]
    %v428 = vld [vmem:[%s422 + $0x14] sm:$0xf]
    %v429 = vld [vmem:[%s422 + $0x18] sm:$0xf]
    %v430 = vld [vmem:[%s422 + $0x1c] sm:$0xf]
    %v431 = vld [vmem:[%s422 + $0x20] sm:$0xf]
    %v432 = vld [vmem:[%s422 + $0x24] sm:$0xf]
    %v433 = vld [vmem:[%s422 + $0x28] sm:$0xf]
    %v434 = vld [vmem:[%s422 + $0x2c] sm:$0xf]
    %v435 = vld [vmem:[%s422 + $0x30] sm:$0xf]
    %v436 = vld [vmem:[%s422 + $0x34] sm:$0xf]
    %v437 = vld [vmem:[%s422 + $0x38] sm:$0xf]
    %v438 = vld [vmem:[%s422 + $0x3c] sm:$0xf]
    %s439 = scalar_lea.vmem %s4, 2
    %v440 = vld [vmem:[%s439] sm:$0x1]
    %v441 = vpack.c.bf16 %v417, %v417
    %v443 = vlaneseq
    %v444 = vshrl.u32 %v443, 7
    %v445 = vsub.s32 0, %v444
    %v446 = vrot.slane %v440, %v445
    %v464 = vunpack.c.l.b16 %v423
    %v465 = vunpack.c.l.b16 %v424
    %v466 = vunpack.c.l.b16 %v425
    %v467 = vunpack.c.l.b16 %v426
    %v468 = vunpack.c.l.b16 %v427
    %v469 = vunpack.c.l.b16 %v428
    %v470 = vunpack.c.l.b16 %v429
    %v471 = vunpack.c.l.b16 %v430
    %v472 = vunpack.c.l.b16 %v431
    %v473 = vunpack.c.l.b16 %v432
    %v474 = vunpack.c.l.b16 %v433
    %v475 = vunpack.c.l.b16 %v434
    %v476 = vunpack.c.l.b16 %v435
    %v477 = vunpack.c.l.b16 %v436
    %v478 = vunpack.c.l.b16 %v437
    %v479 = vunpack.c.l.b16 %v438
    %v480 = vpack.c.b16 %v465, %v464
    %v481 = vpack.c.b16 %v467, %v466
    %v482 = vpack.c.b16 %v469, %v468
    %v483 = vpack.c.b16 %v471, %v470
    %v484 = vpack.c.b16 %v473, %v472
    %v485 = vpack.c.b16 %v475, %v474
    %v486 = vpack.c.b16 %v477, %v476
    %v487 = vpack.c.b16 %v479, %v478
    %496 = vmatprep.subr.bf16.mxu0 0
    %497 = vmatpush1.bf16.msra.mxu0 %v487
    %498 = vmatprep.subr.bf16.mxu0 0
    %499 = vmatpush1.bf16.msra.mxu0 %v486
    %500 = vmatprep.subr.bf16.mxu0 0
    %501 = vmatpush1.bf16.msra.mxu0 %v485
    %502 = vmatprep.subr.bf16.mxu0 0
    %503 = vmatpush1.bf16.msra.mxu0 %v484
    %504 = vmatprep.subr.bf16.mxu0 0
    %505 = vmatpush1.bf16.msra.mxu0 %v483
    %506 = vmatprep.subr.bf16.mxu0 0
    %507 = vmatpush1.bf16.msra.mxu0 %v482
    %508 = vmatprep.subr.bf16.mxu0 0
    %509 = vmatpush1.bf16.msra.mxu0 %v481
    %510 = vmatprep.subr.bf16.mxu0 0
    %511 = vmatpush1.bf16.msra.mxu0 %v480
    %512 = vmatprep.subr.bf16.mxu0 0
    %513 = vmatpush2.bf16.msra.mxu0 0
    %514 = vmatprep.subr.bf16.mxu0 0
    %515 = vmatpush2.bf16.msra.mxu0 0
    %516 = vmatprep.subr.bf16.mxu0 0
    %517 = vmatpush2.bf16.msra.mxu0 0
    %518 = vmatprep.subr.bf16.mxu0 0
    %519 = vmatpush2.bf16.msra.mxu0 0
    %520 = vmatprep.subr.bf16.mxu0 0
    %521 = vmatpush2.bf16.msra.mxu0 0
    %522 = vmatprep.subr.bf16.mxu0 0
    %523 = vmatpush2.bf16.msra.mxu0 0
    %524 = vmatprep.subr.bf16.mxu0 0
    %525 = vmatpush2.bf16.msra.mxu0 0
    %526 = vmatprep.subr.bf16.mxu0 0
    %527 = vmatpush2.bf16.msra.mxu0 0
    %528 = vmatprep.mubr.bf16.mxu0 0
    %529 = vmatmul.mubr.bf16.gmra.mxu0 %v441
    %v530 = vpop.f32.mrf.mxu0
    %v531 = vadd.f32 %v446, %v530
    %v532 = vpop.f32.mrf.mxu0
    %v533 = vpop.f32.mrf.mxu0
    %v534 = vpop.f32.mrf.mxu0
    %535 = vdwg.mxu0
    %v536 = vmax.f32 %v531, 0.0
    %s537 = scalar_lea.vmem [#allocation7], 192
    %v538 = vld [vmem:[%s537] sm:$0xf]
    %v539 = vld [vmem:[%s537 + $0x4] sm:$0xf]
    %v540 = vld [vmem:[%s537 + $0x8] sm:$0xf]
    %v541 = vld [vmem:[%s537 + $0xc] sm:$0xf]
    %v542 = vld [vmem:[%s537 + $0x10] sm:$0xf]
    %v543 = vld [vmem:[%s537 + $0x14] sm:$0xf]
    %v544 = vld [vmem:[%s537 + $0x18] sm:$0xf]
    %v545 = vld [vmem:[%s537 + $0x1c] sm:$0xf]
    %v546 = vld [vmem:[%s537 + $0x20] sm:$0xf]
    %v547 = vld [vmem:[%s537 + $0x24] sm:$0xf]
    %v548 = vld [vmem:[%s537 + $0x28] sm:$0xf]
    %v549 = vld [vmem:[%s537 + $0x2c] sm:$0xf]
    %v550 = vld [vmem:[%s537 + $0x30] sm:$0xf]
    %v551 = vld [vmem:[%s537 + $0x34] sm:$0xf]
    %v552 = vld [vmem:[%s537 + $0x38] sm:$0xf]
    %v553 = vld [vmem:[%s537 + $0x3c] sm:$0xf]
    %s554 = scalar_lea.vmem %s4, 3
    %v555 = vld [vmem:[%s554] sm:$0x1]
    %v556 = vpack.c.bf16 %v536, %v536
    %v558 = vlaneseq
    %v559 = vshrl.u32 %v558, 7
    %v560 = vsub.s32 0, %v559
    %v561 = vrot.slane %v555, %v560
    %v579 = vunpack.c.l.b16 %v538
    %v580 = vunpack.c.l.b16 %v539
    %v581 = vunpack.c.l.b16 %v540
    %v582 = vunpack.c.l.b16 %v541
    %v583 = vunpack.c.l.b16 %v542
    %v584 = vunpack.c.l.b16 %v543
    %v585 = vunpack.c.l.b16 %v544
    %v586 = vunpack.c.l.b16 %v545
    %v587 = vunpack.c.l.b16 %v546
    %v588 = vunpack.c.l.b16 %v547
    %v589 = vunpack.c.l.b16 %v548
    %v590 = vunpack.c.l.b16 %v549
    %v591 = vunpack.c.l.b16 %v550
    %v592 = vunpack.c.l.b16 %v551
    %v593 = vunpack.c.l.b16 %v552
    %v594 = vunpack.c.l.b16 %v553
    %v595 = vpack.c.b16 %v580, %v579
    %v596 = vpack.c.b16 %v582, %v581
    %v597 = vpack.c.b16 %v584, %v583
    %v598 = vpack.c.b16 %v586, %v585
    %v599 = vpack.c.b16 %v588, %v587
    %v600 = vpack.c.b16 %v590, %v589
    %v601 = vpack.c.b16 %v592, %v591
    %v602 = vpack.c.b16 %v594, %v593
    %611 = vmatprep.subr.bf16.mxu0 0
    %612 = vmatpush1.bf16.msra.mxu0 %v602
    %613 = vmatprep.subr.bf16.mxu0 0
    %614 = vmatpush1.bf16.msra.mxu0 %v601
    %615 = vmatprep.subr.bf16.mxu0 0
    %616 = vmatpush1.bf16.msra.mxu0 %v600
    %617 = vmatprep.subr.bf16.mxu0 0
    %618 = vmatpush1.bf16.msra.mxu0 %v599
    %619 = vmatprep.subr.bf16.mxu0 0
    %620 = vmatpush1.bf16.msra.mxu0 %v598
    %621 = vmatprep.subr.bf16.mxu0 0
    %622 = vmatpush1.bf16.msra.mxu0 %v597
    %623 = vmatprep.subr.bf16.mxu0 0
    %624 = vmatpush1.bf16.msra.mxu0 %v596
    %625 = vmatprep.subr.bf16.mxu0 0
    %626 = vmatpush1.bf16.msra.mxu0 %v595
    %627 = vmatprep.subr.bf16.mxu0 0
    %628 = vmatpush2.bf16.msra.mxu0 0
    %629 = vmatprep.subr.bf16.mxu0 0
    %630 = vmatpush2.bf16.msra.mxu0 0
    %631 = vmatprep.subr.bf16.mxu0 0
    %632 = vmatpush2.bf16.msra.mxu0 0
    %633 = vmatprep.subr.bf16.mxu0 0
    %634 = vmatpush2.bf16.msra.mxu0 0
    %635 = vmatprep.subr.bf16.mxu0 0
    %636 = vmatpush2.bf16.msra.mxu0 0
    %637 = vmatprep.subr.bf16.mxu0 0
    %638 = vmatpush2.bf16.msra.mxu0 0
    %639 = vmatprep.subr.bf16.mxu0 0
    %640 = vmatpush2.bf16.msra.mxu0 0
    %641 = vmatprep.subr.bf16.mxu0 0
    %642 = vmatpush2.bf16.msra.mxu0 0
    %643 = vmatprep.mubr.bf16.mxu0 0
    %644 = vmatmul.mubr.bf16.gmra.mxu0 %v556
    %v645 = vpop.f32.mrf.mxu0
    %v646 = vadd.f32 %v561, %v645
    %v647 = vpop.f32.mrf.mxu0
    %v648 = vpop.f32.mrf.mxu0
    %v649 = vpop.f32.mrf.mxu0
    %650 = vdwg.mxu0
    %v651 = vmax.f32 %v646, 0.0
    %v652 = vrot.slane %v651, 4
    %v653 = vadd.f32 %v651, %v652
    %v654 = vrot.slane %v653, 2
    %v655 = vadd.f32 %v653, %v654
    %v656 = vrot.slane %v655, 1
    %v657 = vadd.f32 %v655, %v656
    %v658 = vmul.f32 %v657, 0.125
    %v659 = vsub.f32 %v651, %v658
    %v660 = vmul.f32 %v659, %v659
    %v661 = vrot.slane %v660, 4
    %v662 = vadd.f32 %v660, %v661
    %v663 = vrot.slane %v662, 2
    %v664 = vadd.f32 %v662, %v663
    %v665 = vrot.slane %v664, 1
    %v666 = vadd.f32 %v664, %v665
    %v667 = vmul.f32 %v666, 0.125
    %v668 = vmax.f32 %v667, 0.0
    %v669 = vadd.f32 %v668, 1e-05
    %v670 = vrsqrt.pop %v669
    %v671 = vmul.f32 %v670, %v419
    %v672 = vlaneseq
    %v673 = vshrl.u32 %v672, 7
    %v674 = vsub.s32 0, %v673
    %v675 = vrot.slane %v671, %v674
    %v676 = vmul.f32 %v659, %v675
    %v678 = vlaneseq
    %v679 = vshrl.u32 %v678, 7
    %v680 = vsub.s32 0, %v679
    %v681 = vrot.slane %v421, %v680
    %v683 = vadd.f32 %v676, %v681
    %v684 = vadd.f32 %v683, %v417
    %v685 = vpack.c.bf16 %v684, %v684
    %v686 = vld [vmem:[#allocation8] sm:$0xf]
    %v687 = vld [vmem:[#allocation8 + $0x4] sm:$0xf]
    %v688 = vld [vmem:[#allocation8 + $0x8] sm:$0xf]
    %v689 = vld [vmem:[#allocation8 + $0xc] sm:$0xf]
    %v690 = vld [vmem:[#allocation8 + $0x10] sm:$0xf]
    %v691 = vld [vmem:[#allocation8 + $0x14] sm:$0xf]
    %v692 = vld [vmem:[#allocation8 + $0x18] sm:$0xf]
    %v693 = vld [vmem:[#allocation8 + $0x1c] sm:$0xf]
    %v694 = vld [vmem:[#allocation8 + $0x20] sm:$0xf]
    %v695 = vld [vmem:[#allocation8 + $0x24] sm:$0xf]
    %v696 = vld [vmem:[#allocation8 + $0x28] sm:$0xf]
    %v697 = vld [vmem:[#allocation8 + $0x2c] sm:$0xf]
    %v698 = vld [vmem:[#allocation8 + $0x30] sm:$0xf]
    %v699 = vld [vmem:[#allocation8 + $0x34] sm:$0xf]
    %v700 = vld [vmem:[#allocation8 + $0x38] sm:$0xf]
    %v701 = vld [vmem:[#allocation8 + $0x3c] sm:$0xf]
    %v702 = vld [vmem:[%s8] sm:$0x1]
    %v704 = vlaneseq
    %v705 = vshrl.u32 %v704, 7
    %v706 = vsub.s32 0, %v705
    %v707 = vrot.slane %v702, %v706
    %v725 = vunpack.c.l.b16 %v686
    %v726 = vunpack.c.l.b16 %v687
    %v727 = vunpack.c.l.b16 %v688
    %v728 = vunpack.c.l.b16 %v689
    %v729 = vunpack.c.l.b16 %v690
    %v730 = vunpack.c.l.b16 %v691
    %v731 = vunpack.c.l.b16 %v692
    %v732 = vunpack.c.l.b16 %v693
    %v733 = vunpack.c.l.b16 %v694
    %v734 = vunpack.c.l.b16 %v695
    %v735 = vunpack.c.l.b16 %v696
    %v736 = vunpack.c.l.b16 %v697
    %v737 = vunpack.c.l.b16 %v698
    %v738 = vunpack.c.l.b16 %v699
    %v739 = vunpack.c.l.b16 %v700
    %v740 = vunpack.c.l.b16 %v701
    %v741 = vpack.c.b16 %v726, %v725
    %v742 = vpack.c.b16 %v728, %v727
    %v743 = vpack.c.b16 %v730, %v729
    %v744 = vpack.c.b16 %v732, %v731
    %v745 = vpack.c.b16 %v734, %v733
    %v746 = vpack.c.b16 %v736, %v735
    %v747 = vpack.c.b16 %v738, %v737
    %v748 = vpack.c.b16 %v740, %v739
    %757 = vmatprep.subr.bf16.mxu0 0
    %758 = vmatpush1.bf16.msra.mxu0 %v748
    %759 = vmatprep.subr.bf16.mxu0 0
    %760 = vmatpush1.bf16.msra.mxu0 %v747
    %761 = vmatprep.subr.bf16.mxu0 0
    %762 = vmatpush1.bf16.msra.mxu0 %v746
    %763 = vmatprep.subr.bf16.mxu0 0
    %764 = vmatpush1.bf16.msra.mxu0 %v745
    %765 = vmatprep.subr.bf16.mxu0 0
    %766 = vmatpush1.bf16.msra.mxu0 %v744
    %767 = vmatprep.subr.bf16.mxu0 0
    %768 = vmatpush1.bf16.msra.mxu0 %v743
    %769 = vmatprep.subr.bf16.mxu0 0
    %770 = vmatpush1.bf16.msra.mxu0 %v742
    %771 = vmatprep.subr.bf16.mxu0 0
    %772 = vmatpush1.bf16.msra.mxu0 %v741
    %773 = vmatprep.subr.bf16.mxu0 0
    %774 = vmatpush2.bf16.msra.mxu0 0
    %775 = vmatprep.subr.bf16.mxu0 0
    %776 = vmatpush2.bf16.msra.mxu0 0
    %777 = vmatprep.subr.bf16.mxu0 0
    %778 = vmatpush2.bf16.msra.mxu0 0
    %779 = vmatprep.subr.bf16.mxu0 0
    %780 = vmatpush2.bf16.msra.mxu0 0
    %781 = vmatprep.subr.bf16.mxu0 0
    %782 = vmatpush2.bf16.msra.mxu0 0
    %783 = vmatprep.subr.bf16.mxu0 0
    %784 = vmatpush2.bf16.msra.mxu0 0
    %785 = vmatprep.subr.bf16.mxu0 0
    %786 = vmatpush2.bf16.msra.mxu0 0
    %787 = vmatprep.subr.bf16.mxu0 0
    %788 = vmatpush2.bf16.msra.mxu0 0
    %789 = vmatprep.mubr.bf16.mxu0 0
    %790 = vmatmul.mubr.bf16.gmra.mxu0 %v685
    %v791 = vpop.f32.mrf.mxu0
    %v792 = vadd.f32 %v707, %v791
    %v793 = vpop.f32.mrf.mxu0
    %v794 = vpop.f32.mrf.mxu0
    %v795 = vpop.f32.mrf.mxu0
    %796 = vdwg.mxu0
    %797 = vst [vmem:[#allocation10] sm:$0xff] %v792
    // Predicated region
    $region54: #{tpu_custom_call.1} parent=1 // pred_check
      _
    $region55: #{tpu_custom_call.1} parent=1 // pred_check_branch
      %799 = sbr.rel (0) target = $region57
    $region56: #{tpu_custom_call.1} parent=1 // pred_region
      %s801 = ssub.s32 128, 128
      %802 = vsyncadd [#allocation4], %s801
      %s804 = sshll.u32 [#allocation10], 4
      %s805 = int_to_ptr.vmem [resolvable:$true] %s804
      %807 = dma.vmem_to_hbm [thread:$0]  %s805, 128, %s9, [#allocation4]
    $region57: #{tpu_custom_call.1} parent=1 // pred_fallthru
      _
    // Predicated region
    $region58: #{tpu_custom_call.1} parent=1 // pred_check
      _
    $region59: #{tpu_custom_call.1} parent=1 // pred_check_branch
      %809 = sbr.rel (0) target = $region61
    $region60: #{tpu_custom_call.1} parent=1 // pred_region
      %810 = dma.done [#allocation4], 128
    $region61: #{tpu_custom_call.1} parent=1 // pred_fallthru
      _
    %811 = vsyncpa [#allocation3], 1
    %812 = vsyncpa [#allocation6], 1
    %813 = vsyncpa [#allocation9], 1
    %814 = vsyncpa [#allocation4], 1

</llo_original>
